<compile_context>
chip_gen: v7x
topology: tpu7x:2x2x1
jax: 0.10.0
libtpu: 0.0.40
codegen_flags: <defaults>
</compile_context>

<pallas_src>
import functools
import math

import jax
import jax.numpy as jnp
from jax import lax
from jax.experimental import pallas as pl
from jax.experimental.pallas import tpu as pltpu


# ----------------------------------------------------------------------------
# small helpers
# ----------------------------------------------------------------------------
def _cdiv(a, b):
    return (a + b - 1) // b


def _round_up(x, m):
    return ((x + m - 1) // m) * m


def _vmem_capacity_bytes():
    """Physical VMEM of the local TPU (conservative 64 MiB fallback = v7x/TC)."""
    try:
        return int(pltpu.get_tpu_info().vmem_capacity_bytes)
    except Exception:
        return 64 << 20


def _tpu_supports_bf16_eup():
    """bf16 transcendental path exists on v6e / v7x; keep f32 on v5e and older."""
    try:
        kind = jax.devices()[0].device_kind.lower()
    except Exception:
        return False
    return ("v6" in kind) or ("v7" in kind)


# ----------------------------------------------------------------------------
# TRAINABLE=False branch.
#   torch: softmax(x @ x.T, dim=1).T @ x, then .mean(dim=0, keepdim=True)
#   Every softmax row sums to 1  =>  result == mean(x, axis=0) exactly.
#   Row-tiled column-sum reduction; grid = (n_parts, tiles_per_part) where the
#   leading "parallel" axis splits the tiles across TensorCores and each part
#   writes a private (already 1/N-scaled) partial the wrapper sums.
# ----------------------------------------------------------------------------
def _mean_rows_kernel(x_ref, o_ref, acc_ref, *, n_rows, tiles_per_part,
                      needs_mask):
    i = pl.program_id(1)

    @pl.when(i == 0)
    def _():
        acc_ref[...] = jnp.zeros_like(acc_ref)

    x = x_ref[...].astype(jnp.float32)                         # (TN, D)
    tn = x_ref.shape[0]

    if needs_mask:
        # Logical tile id in the un-split tiling; tiles below n_rows // tn are
        # guaranteed fully in-bounds -> plain sum (no mask on the hot path).
        t = pl.program_id(0) * tiles_per_part + i

        @pl.when(t < n_rows // tn)
        def _():
            acc_ref[...] += jnp.sum(x, axis=0, keepdims=True)

        @pl.when(t >= n_rows // tn)
        def _():
            row_ids = t * tn + lax.broadcasted_iota(jnp.int32, (tn, 1), 0)
            xm = jnp.where(row_ids < n_rows, x, 0.0)
            acc_ref[...] += jnp.sum(xm, axis=0, keepdims=True)
    else:
        acc_ref[...] += jnp.sum(x, axis=0, keepdims=True)

    @pl.when(i == pl.num_programs(1) - 1)
    def _():
        scaled = (acc_ref[...] * (1.0 / n_rows)).astype(o_ref.dtype)   # (1, D)
        o_ref[...] = scaled.reshape(o_ref.shape)


def attn_sum_2d(x, *, tile_n=None):
    """TRAINABLE=False forward. x: (N, D) -> (1, D)."""
    n, d = x.shape
    itemsize = x.dtype.itemsize
    cap = _vmem_capacity_bytes()

    # Row tile: as large as VMEM comfortably allows (>=512 rows ~85% of the
    # HBM roofline; bigger amortizes the ~0.35us per-grid-step overhead).
    tn = 1024 if tile_n is None else tile_n
    if tn >= n:
        tn = n
    else:
        tn = max(8, (tn // 8) * 8)
        while tn > 8 and 2 * tn * d * itemsize > cap // 4:     # 2 = double buffer
            tn = max(8, ((tn // 2) // 8) * 8)

    total_tiles = _cdiv(n, tn)
    n_parts = 2 if total_tiles >= 2 else 1          # dual-TensorCore split (v7x)
    tiles_per_part = _cdiv(total_tiles, n_parts)
    needs_mask = (n % tn != 0) or (n_parts * tiles_per_part != total_tiles)

    needed = 2 * tn * d * itemsize + 2 * 8 * _round_up(d, 128) * 4 + (1 << 20)
    vmem_limit = int(min(cap * 9 // 10, max(4 * needed, 16 << 20)))

    out = pl.pallas_call(
        functools.partial(_mean_rows_kernel, n_rows=n,
                          tiles_per_part=tiles_per_part, needs_mask=needs_mask),
        out_shape=jax.ShapeDtypeStruct((n_parts, 1, d), x.dtype),
        grid=(n_parts, tiles_per_part),
        in_specs=[pl.BlockSpec(
            (tn, d),
            # clamp so the (at most one) fully-OOB tile of an odd split stays
            # in-bounds; its rows are masked out by global row id anyway.
            lambda c, i: (jnp.minimum(c * tiles_per_part + i, total_tiles - 1), 0))],
        out_specs=pl.BlockSpec((1, 1, d), lambda c, i: (c, 0, 0)),
        scratch_shapes=[pltpu.VMEM((1, d), jnp.float32)],
        compiler_params=pltpu.CompilerParams(
            dimension_semantics=("parallel", "arbitrary"),
            vmem_limit_bytes=vmem_limit),
    )(x)
    # Each part is already scaled by 1/N; summing partials gives the mean.
    return jnp.sum(out.reshape(n_parts, d), axis=0, keepdims=True)


# ----------------------------------------------------------------------------
# TRAINABLE=True branch: nn.MultiheadAttention(embed_dim=E, num_heads=1),
# q = k = v = input (unbatched (N, E)), then mean over dim 0.
# Query-row tiled; K/V resident in VMEM scratch; row-mean hoisted before P@V.
# ----------------------------------------------------------------------------
def _mha_mean_kernel(xq_ref, xf_ref, wq_ref, bq_ref, wk_ref, bk_ref,
                     wv_ref, bv_ref, wo_ref, bo_ref, o_ref,
                     k_scr, v_scr, w_scr, *, n_rows, ragged, exp_dtype):
    i = pl.program_id(0)
    tq = xq_ref.shape[0]

    @pl.when(i == 0)
    def _():
        # K = x @ Wk^T + bk ; V = x @ Wv^T + bv  (computed once, stay resident)
        xf = xf_ref[...]
        k_scr[...] = (jnp.dot(xf, wk_ref[...],
                              preferred_element_type=jnp.float32) + bk_ref[...])
        v_scr[...] = (jnp.dot(xf, wv_ref[...],
                              preferred_element_type=jnp.float32) + bv_ref[...])
        w_scr[...] = jnp.zeros_like(w_scr)

    # Per-tile queries; the 1/sqrt(E) scale is folded into wq/bq by the wrapper.
    q = (jnp.dot(xq_ref[...], wq_ref[...],
                 preferred_element_type=jnp.float32) + bq_ref[...])       # (TQ, E)
    if ragged:
        row_ids = i * tq + lax.broadcasted_iota(jnp.int32, (tq, 1), 0)
        valid = row_ids < n_rows
        q = jnp.where(valid, q, 0.0)     # zero garbage rows of the last tile

    # scores against resident K:  q @ K^T  (contract dim 1 with dim 1).
    s = lax.dot_general(q, k_scr[...], (((1,), (1,)), ((), ())),
                        preferred_element_type=jnp.float32)               # (TQ, N)
    m = jnp.max(s, axis=1, keepdims=True)
    p = jnp.exp((s - m).astype(exp_dtype))       # bf16 exp on v6e/v7x (EUP slot)
    p32 = p.astype(jnp.float32)
    l = jnp.sum(p32, axis=1, keepdims=True)      # f32 row sums
    r = 1.0 / (l * float(n_rows))                # exact per-row 1/(N*l_i)
    if ragged:
        r = jnp.where(valid, r, 0.0)
    # Row-mean hoisted before P@V:  w += sum_rows(p / (N*l))        (1, N)
    w_scr[...] += jnp.sum(p32 * r, axis=0, keepdims=True)

    @pl.when(i == pl.num_programs(0) - 1)
    def _():
        av = jnp.dot(w_scr[...], v_scr[...],
                     preferred_element_type=jnp.float32)                  # (1, E)
        out = jnp.dot(av, wo_ref[...],
                      preferred_element_type=jnp.float32) + bo_ref[...]
        o_ref[...] = out.astype(o_ref.dtype)


def attn_sum_2d_trainable(x, in_proj_w, in_proj_b, out_proj_w, out_proj_b,
                          *, tile_q=None, bf16_exp=None):
    """TRAINABLE=True forward. x: (N, E) -> (E,) (mean over dim 0)."""
    n, e = x.shape
    scale = 1.0 / math.sqrt(e)

    # Lane-aligned q/k/v: keep three separate (E,E) weights (a fused (E,3E)
    # projection would need lane-misaligned slices when E % 128 != 0), and
    # fold the query scale into Wq / bq (no extra (N,E) multiply in-kernel).
    wq_t = (in_proj_w[:e] * scale).T
    wk_t = in_proj_w[e:2 * e].T
    wv_t = in_proj_w[2 * e:].T
    bq = (in_proj_b[:e] * scale).reshape(1, e)
    bk = in_proj_b[e:2 * e].reshape(1, e)
    bv = in_proj_b[2 * e:].reshape(1, e)
    wo_t = out_proj_w.T
    bo = out_proj_b.reshape(1, e)

    if bf16_exp is None:
        bf16_exp = _tpu_supports_bf16_eup()
    exp_dtype = jnp.bfloat16 if bf16_exp else jnp.float32

    itemsize = x.dtype.itemsize
    cap = _vmem_capacity_bytes()
    n_lanes = _round_up(n, 128)

    def vmem_need(tq_):
        return (n * e * itemsize                  # resident x (for K/V)
                + 2 * tq_ * e * itemsize          # double-buffered query tiles
                + 2 * n * e * 4                   # K, V scratch (f32)
                + 8 * n_lanes * 4                 # w accumulator (padded)
                + 5 * e * e * 4 + 8 * e * 4       # weights + biases
                + 4 * tq_ * n_lanes * 4)          # s / p / temporaries

    tq = 512 if tile_q is None else tile_q
    if tq >= n:
        tq = n
    else:
        tq = max(8, (tq // 8) * 8)
        while tq > 8 and vmem_need(tq) > cap * 7 // 10:
            tq = max(8, ((tq // 2) // 8) * 8)
    vmem_limit = int(min(cap * 9 // 10, max(2 * vmem_need(tq), 32 << 20)))

    ragged = (n % tq != 0)
    grid = (_cdiv(n, tq),)

    out = pl.pallas_call(
        functools.partial(_mha_mean_kernel, n_rows=n, ragged=ragged,
                          exp_dtype=exp_dtype),
        out_shape=jax.ShapeDtypeStruct((1, e), x.dtype),
        grid=grid,
        in_specs=[
            pl.BlockSpec((tq, e), lambda i: (i, 0)),    # query row tiles (pipelined)
            pl.BlockSpec((n, e), lambda i: (0, 0)),     # full x (K/V, resident)
            pl.BlockSpec((e, e), lambda i: (0, 0)),     # Wq^T (pre-scaled)
            pl.BlockSpec((1, e), lambda i: (0, 0)),     # bq   (pre-scaled)
            pl.BlockSpec((e, e), lambda i: (0, 0)),     # Wk^T
            pl.BlockSpec((1, e), lambda i: (0, 0)),     # bk
            pl.BlockSpec((e, e), lambda i: (0, 0)),     # Wv^T
            pl.BlockSpec((1, e), lambda i: (0, 0)),     # bv
            pl.BlockSpec((e, e), lambda i: (0, 0)),     # Wo^T
            pl.BlockSpec((1, e), lambda i: (0, 0)),     # bo
        ],
        out_specs=pl.BlockSpec((1, e), lambda i: (0, 0)),
        scratch_shapes=[
            pltpu.VMEM((n, e), jnp.float32),            # K
            pltpu.VMEM((n, e), jnp.float32),            # V
            pltpu.VMEM((1, n), jnp.float32),            # softmax row-weight acc
        ],
        compiler_params=pltpu.CompilerParams(
            dimension_semantics=("arbitrary",),
            vmem_limit_bytes=vmem_limit),
    )(x, x, wq_t, bq, wk_t, bk, wv_t, bv, wo_t, bo)
    return out[0]


# ----------------------------------------------------------------------------
# Pure-JAX references (full torch math, for correctness checks only).
# ----------------------------------------------------------------------------
def _ref_attn_sum(x):
    s = x @ x.T
    p = jax.nn.softmax(s, axis=1)
    return jnp.mean(p.T @ x, axis=0, keepdims=True)


def _ref_mha_sum(x, in_proj_w, in_proj_b, out_proj_w, out_proj_b):
    e = x.shape[1]
    wq, wk, wv = in_proj_w[:e], in_proj_w[e:2 * e], in_proj_w[2 * e:]
    bq, bk, bv = in_proj_b[:e], in_proj_b[e:2 * e], in_proj_b[2 * e:]
    q = (x @ wq.T + bq) / math.sqrt(e)
    k = x @ wk.T + bk
    v = x @ wv.T + bv
    p = jax.nn.softmax(q @ k.T, axis=1)
    out = (p @ v) @ out_proj_w.T + out_proj_b
    return jnp.mean(out, axis=0)


if __name__ == "__main__":
    key = jax.random.PRNGKey(0)
    N, D = 8, 32
    kx, kw, kb, kwo, kbo, kx2 = jax.random.split(key, 6)
    x = jax.random.normal(kx, (N, D), dtype=jnp.float32)

    in_proj_w = 0.1 * jax.random.normal(kw, (3 * D, D), dtype=jnp.float32)
    in_proj_b = 0.1 * jax.random.normal(kb, (3 * D,), dtype=jnp.float32)
    out_proj_w = 0.1 * jax.random.normal(kwo, (D, D), dtype=jnp.float32)
    out_proj_b = 0.1 * jax.random.normal(kbo, (D,), dtype=jnp.float32)

    def run_trainable(*args, **kw):
        try:
            r = attn_sum_2d_trainable(*args, **kw)
            jax.block_until_ready(r)
            return r
        except Exception:
            # Fallback to the f32 exp path if the bf16 EUP path is unavailable
            # on this chip / toolchain.
            r = attn_sum_2d_trainable(*args, bf16_exp=False, **kw)
            jax.block_until_ready(r)
            return r

    # --- default (TRAINABLE=False) branch, small shape ---
    out = attn_sum_2d(x)
    jax.block_until_ready(out)
    assert out.shape == (1, D)
    assert jnp.allclose(out, _ref_attn_sum(x), atol=1e-4, rtol=1e-4)

    # --- TRAINABLE=True branch, small shape ---
    out_t = run_trainable(x, in_proj_w, in_proj_b, out_proj_w, out_proj_b)
    assert out_t.shape == (D,)
    ref_t = _ref_mha_sum(x, in_proj_w, in_proj_b, out_proj_w, out_proj_b)
    # tolerance covers the bf16-exp path on v6e/v7x (f32 on v5-class chips)
    assert jnp.allclose(out_t, ref_t, atol=5e-3, rtol=2e-2)

    # --- larger N: exercises row tiling, ragged masking, dual-part split ---
    N2 = 1000
    x2 = jax.random.normal(kx2, (N2, D), dtype=jnp.float32)

    out2 = attn_sum_2d(x2, tile_n=256)
    jax.block_until_ready(out2)
    assert jnp.allclose(out2, _ref_attn_sum(x2), atol=1e-4, rtol=1e-4)

    out2_t = run_trainable(x2, in_proj_w, in_proj_b, out_proj_w, out_proj_b,
                           tile_q=256)
    ref2_t = _ref_mha_sum(x2, in_proj_w, in_proj_b, out_proj_w, out_proj_b)
    assert jnp.allclose(out2_t, ref2_t, atol=5e-3, rtol=2e-2)

    print("KERNEL_OK")
</pallas_src>

<mosaic_0001>
module attributes {stable_mosaic.version = 11 : i64} {
  func.func @_mean_rows_kernel(%arg0: i32, %arg1: i32, %arg2: memref<8x32xf32, #tpu.memory_space<vmem>>, %arg3: memref<1x1x32xf32, #tpu.memory_space<vmem>>, %arg4: memref<1x32xf32, #tpu.memory_space<vmem>>) attributes {dimension_semantics = [#tpu.dimension_semantics<parallel>, #tpu.dimension_semantics<arbitrary>], iteration_bounds = array<i64: 1, 1>, scalar_prefetch = 0 : i64, scratch_operands = 1 : i64, tpu.core_type = #tpu.core_type<tc>, window_params = [{transform_indices = @transform_0, window_bounds = array<i64: 8, 32>}, {transform_indices = @transform_1, window_bounds = array<i64: 1, 1, 32>}]} {
    %c0_i32 = arith.constant 0 : i32
    %0 = arith.cmpi eq, %arg1, %c0_i32 : i32
    %1 = arith.extui %0 : i1 to i32
    %c0_i32_0 = arith.constant 0 : i32
    %2 = arith.cmpi ne, %1, %c0_i32_0 : i32
    scf.if %2 {
      %cst_8 = arith.constant 0.000000e+00 : f32
      %12 = vector.broadcast %cst_8 : f32 to vector<1x32xf32>
      %c0_9 = arith.constant 0 : index
      %c0_10 = arith.constant 0 : index
      %13 = vector.load %arg4[%c0_9, %c0_10] : memref<1x32xf32, #tpu.memory_space<vmem>>, vector<1x32xf32>
      tpu.vector_store %arg4[%c0_9, %c0_10], %12 {strides = array<i32>} : memref<1x32xf32, #tpu.memory_space<vmem>>, vector<1x32xf32>,
    } else {
    }
    %c0 = arith.constant 0 : index
    %c0_1 = arith.constant 0 : index
    %3 = vector.load %arg2[%c0, %c0_1] : memref<8x32xf32, #tpu.memory_space<vmem>>, vector<8x32xf32>
    %c0_2 = arith.constant 0 : index
    %c0_3 = arith.constant 0 : index
    %4 = vector.load %arg4[%c0_2, %c0_3] : memref<1x32xf32, #tpu.memory_space<vmem>>, vector<1x32xf32>
    %cst = arith.constant dense<0.000000e+00> : vector<32xf32>
    %5 = vector.multi_reduction <add>, %3, %cst [0] : vector<8x32xf32> to vector<32xf32>
    %6 = vector.shape_cast %5 : vector<32xf32> to vector<1x32xf32>
    %7 = arith.addf %4, %6 : vector<1x32xf32>
    %c0_4 = arith.constant 0 : index
    %c0_5 = arith.constant 0 : index
    %8 = vector.load %arg4[%c0_4, %c0_5] : memref<1x32xf32, #tpu.memory_space<vmem>>, vector<1x32xf32>
    tpu.vector_store %arg4[%c0_4, %c0_5], %7 {strides = array<i32>} : memref<1x32xf32, #tpu.memory_space<vmem>>, vector<1x32xf32>,
    %c0_i32_6 = arith.constant 0 : i32
    %9 = arith.cmpi eq, %arg1, %c0_i32_6 : i32
    %10 = arith.extui %9 : i1 to i32
    %c0_i32_7 = arith.constant 0 : i32
    %11 = arith.cmpi ne, %10, %c0_i32_7 : i32
    scf.if %11 {
      %c0_8 = arith.constant 0 : index
      %c0_9 = arith.constant 0 : index
      %12 = vector.load %arg4[%c0_8, %c0_9] : memref<1x32xf32, #tpu.memory_space<vmem>>, vector<1x32xf32>
      %cst_10 = arith.constant 1.250000e-01 : f32
      %13 = vector.broadcast %cst_10 : f32 to vector<1x32xf32>
      %14 = arith.mulf %12, %13 : vector<1x32xf32>
      %15 = vector.shape_cast %14 : vector<1x32xf32> to vector<1x1x32xf32>
      %c0_11 = arith.constant 0 : index
      %c0_12 = arith.constant 0 : index
      %c0_13 = arith.constant 0 : index
      %16 = vector.load %arg3[%c0_11, %c0_12, %c0_13] : memref<1x1x32xf32, #tpu.memory_space<vmem>>, vector<1x1x32xf32>
      tpu.vector_store %arg3[%c0_11, %c0_12, %c0_13], %15 {strides = array<i32>} : memref<1x1x32xf32, #tpu.memory_space<vmem>>, vector<1x1x32xf32>,
    } else {
    }
    return
  }
  func.func @transform_0(%arg0: i32, %arg1: i32) -> (i32, i32) {
    %c1_i32 = arith.constant 1 : i32
    %0 = arith.muli %arg0, %c1_i32 : i32
    %1 = arith.addi %0, %arg1 : i32
    %c0_i32 = arith.constant 0 : i32
    %2 = arith.minsi %1, %c0_i32 : i32
    %c0_i32_0 = arith.constant 0 : i32
    %c0_i32_1 = arith.constant 0 : i32
    return %2, %c0_i32_0 : i32, i32
  }
  func.func @transform_1(%arg0: i32, %arg1: i32) -> (i32, i32, i32) {
    %c0_i32 = arith.constant 0 : i32
    %c0_i32_0 = arith.constant 0 : i32
    %c0_i32_1 = arith.constant 0 : i32
    return %arg0, %c0_i32, %c0_i32_0 : i32, i32, i32
  }
}

</mosaic_0001>

<llo_original>
// kernel: tpu_custom_call.1
$region0: #{tpu_custom_call.1}
  #allocation0 [shape = 'u32[]', space=smem, size = 0x4, offset = 0x4, fixed_abs, tag = 'smem constant byte address 0x4 - core index']
  #allocation1 [shape = 'u32[144,128]{1,0:T(1,128)}', space=vmem, size = 0x12000, scoped, tag = 'internal scratch']
  #allocation2 [shape = 'f32[1,32]{1,0:T(1,128)}', space=vmem, size = 0x200, scoped, tag = 'scratch operand']
  %s0 = inlined_call_operand.hbm [shape: f32[8,32], index: 0, kind: input, shape index: {}]
  %s1 = inlined_call_operand.hbm [shape: f32[1,1,32], index: 1, kind: output, shape index: {}]
  %s2 = sld [smem:[#allocation0]]
  $region26: #{tpu_custom_call.1} parent=0
    _
  %s4 = ssub.s32 1, %s2
  %s5 = scalar_select 0, %s4, %s2
  $region1: #{tpu_custom_call.1} parent=0
    #allocation3 [shape = 'u8[4096]{0}', space=vmem, size = 0x1000, scoped, tag = 'input window, operand 0, single buffered']
    #allocation4 [shape = 's32[1]{0}', space=sflag, size = 0x4, scoped, tag = 'scoped memory for tpu_custom_call.1']
    #allocation5 [shape = 's32[1]{0}', space=sflag, size = 0x4, scoped, tag = 'scoped memory for tpu_custom_call.1']
    #allocation6 [shape = 'u8[512]{0}', space=vmem, size = 0x400, scoped, tag = 'output window, operand 0, single buffered']
    %6 = vsyncpa [#allocation4], 0
    %7 = vsyncpa [#allocation5], 0
    // Predicated region
    $region2: #{tpu_custom_call.1} parent=1 // pred_check
      _
    $region3: #{tpu_custom_call.1} parent=1 // pred_check_branch
      %9 = sbr.rel (0) target = $region5
    $region4: #{tpu_custom_call.1} parent=1 // pred_region
      %s10 = sadd.s32 0, 0
      %p11 = scmp.lt.s32.totalorder %s10, 0
      %s12 = scalar_select %p11, %s10, 0
      %s14 = ssub.s32 128, 128
      %15 = vsyncadd [#allocation4], %s14
      %s16 = smul.addr %s12, 128
      %s17 = scalar_lea.hbm %s0, %s16
      %s19 = sshll.u32 [#allocation3], 4
      %s20 = int_to_ptr.vmem [resolvable:$true] %s19
      %22 = dma.hbm_to_vmem [thread:$0]  %s17, 128, %s20, [#allocation4]
    $region5: #{tpu_custom_call.1} parent=1 // pred_fallthru
      _
    // Predicated region
    $region6: #{tpu_custom_call.1} parent=1 // pred_check
      _
    $region7: #{tpu_custom_call.1} parent=1 // pred_check_branch
      %24 = sbr.rel (0) target = $region9
    $region8: #{tpu_custom_call.1} parent=1 // pred_region
      %25 = dma.done [#allocation4], 128
    $region9: #{tpu_custom_call.1} parent=1 // pred_fallthru
      _
    %s26 = sadd.s32 0, 0
    %p27 = scmp.lt.s32.totalorder %s26, 0
    %s28 = scalar_select %p27, %s26, 0
    %p29 = scmp.eq.s32.totalorder 0, 0
    // Predicated region
    $region10: #{tpu_custom_call.1} parent=1 // pred_check
      %p30 = pneg %p29
    $region11: #{tpu_custom_call.1} parent=1 // pred_check_branch
      %32 = sbr.rel (%p30) target = $region13
    $region12: #{tpu_custom_call.1} parent=1 // pred_region
      %vm33 = vcmask 253952
      %34 = vst.msk [vmem:[#allocation2] sm:$0x1] %vm33, 0.0
    $region13: #{tpu_custom_call.1} parent=1 // pred_fallthru
      _
    %v35 = vld [vmem:[#allocation3] sm:$0xff]
    %v36 = vld [vmem:[#allocation2] sm:$0x1]
    %vm37 = vcmask 261120
    %v38 = vsel %vm37, %v35, 0.0
    %v39 = vrot.slane %v38, 4
    %v40 = vadd.f32 %v38, %v39
    %v41 = vrot.slane %v40, 2
    %v42 = vadd.f32 %v40, %v41
    %v43 = vrot.slane %v42, 1
    %v44 = vadd.f32 %v42, %v43
    %v45 = vadd.f32 %v36, %v44
    %vm46 = vcmask 253952
    %47 = vst.msk [vmem:[#allocation2] sm:$0x1] %vm46, %v45
    // Predicated region
    $region14: #{tpu_custom_call.1} parent=1 // pred_check
      %p48 = pneg %p29
    $region15: #{tpu_custom_call.1} parent=1 // pred_check_branch
      %50 = sbr.rel (%p48) target = $region17
    $region16: #{tpu_custom_call.1} parent=1 // pred_region
      %v51 = vld [vmem:[#allocation2] sm:$0x1]
      %v52 = vmul.f32 %v51, 0.125
      %53 = vst.msk [vmem:[#allocation6] sm:$0x1] %vm46, %v52
    $region17: #{tpu_custom_call.1} parent=1 // pred_fallthru
      _
    // Predicated region
    $region18: #{tpu_custom_call.1} parent=1 // pred_check
      _
    $region19: #{tpu_custom_call.1} parent=1 // pred_check_branch
      %55 = sbr.rel (0) target = $region21
    $region20: #{tpu_custom_call.1} parent=1 // pred_region
      %s57 = ssub.s32 16, 16
      %58 = vsyncadd [#allocation5], %s57
      %s60 = sshll.u32 [#allocation6], 4
      %s61 = int_to_ptr.vmem [resolvable:$true] %s60
      %63 = dma.vmem_to_hbm [thread:$0]  %s61, 16, %s1, [#allocation5]
    $region21: #{tpu_custom_call.1} parent=1 // pred_fallthru
      _
    // Predicated region
    $region22: #{tpu_custom_call.1} parent=1 // pred_check
      _
    $region23: #{tpu_custom_call.1} parent=1 // pred_check_branch
      %65 = sbr.rel (0) target = $region25
    $region24: #{tpu_custom_call.1} parent=1 // pred_region
      %66 = dma.done [#allocation5], 16
    $region25: #{tpu_custom_call.1} parent=1 // pred_fallthru
      _
    %67 = vsyncpa [#allocation4], 1
    %68 = vsyncpa [#allocation5], 1

</llo_original>
